<compile_context>
chip_gen: v7x
topology: tpu7x:2x2x1
jax: 0.10.0
libtpu: 0.0.40
codegen_flags: <defaults>
</compile_context>

<pallas_src>
import functools

import jax
import jax.numpy as jnp
from jax import lax
from jax.experimental import pallas as pl
from jax.experimental.pallas import tpu as pltpu

_NEG_LARGE = -1e30  # finite class-padding value (no (-inf)-(-inf) NaN paths)


def _ce_kernel(scores_ref, tgt_ref, nll_ref, m_ref, l_ref, p_ref,
               *, n_valid, n_classes, tile_n, tile_c,
               needs_c_mask, needs_row_mask):
    i = pl.program_id(0)    # batch-tile index   ("parallel")
    j = pl.program_id(1)    # class-tile index   ("arbitrary" reduction)
    nj = pl.num_programs(1)

    @pl.when(j == 0)
    def _():
        m_ref[...] = jnp.full_like(m_ref, -jnp.inf)
        l_ref[...] = jnp.zeros_like(l_ref)
        p_ref[...] = jnp.zeros_like(p_ref)

    s = scores_ref[...].astype(jnp.float32)   # (tile_n, tile_c), f32 compute
    t = tgt_ref[...]                          # (tile_n, 1) int32

    # (1, tile_c) lane iota: local class index of each lane in this chunk.
    lane = lax.broadcasted_iota(jnp.int32, (1, tile_c), 1)

    if needs_c_mask:
        # Class tail of the last block holds undefined data -> mask it BEFORE
        # any use (max / exp-sum / gather).  where/select does not propagate
        # NaNs from the unselected branch.
        c_rem = n_classes - j * tile_c        # valid lanes in this block
        s = jnp.where(lane < c_rem, s, _NEG_LARGE)

    # Online (flash-style) log-sum-exp over class chunks.
    m_prev = m_ref[...]
    m_new = jnp.maximum(m_prev, jnp.max(s, axis=-1, keepdims=True))
    l_ref[...] = (l_ref[...] * jnp.exp(m_prev - m_new)
                  + jnp.sum(jnp.exp(s - m_new), axis=-1, keepdims=True))
    m_ref[...] = m_new

    # "Gather" the target-class logit via a masked reduction.  The (1, tile_c)
    # lane iota is compared against the per-row local target index, avoiding a
    # full-tile iota materialization + full-tile add.
    t_local = t - j * tile_c                  # (tile_n, 1)
    p_ref[...] += jnp.sum(jnp.where(lane == t_local, s, 0.0),
                          axis=-1, keepdims=True)

    @pl.when(j == nj - 1)
    def _():
        nll = m_ref[...] + jnp.log(l_ref[...]) - p_ref[...]   # (tile_n, 1)
        if needs_row_mask:
            # Zero padded (invalid) batch-tail rows so the wrapper can sum
            # the whole output blindly.
            row = lax.broadcasted_iota(jnp.int32, nll.shape, 0)
            nll = jnp.where(i * tile_n + row < n_valid, nll, 0.0)
        nll_ref[...] = nll


def _round_up(x, m):
    return ((x + m - 1) // m) * m


def _choose_tiles(n, c, in_itemsize):
    # Generation-aware VMEM budget.  Fall back conservatively (v7x-sized) if
    # the hardware query is unavailable.
    try:
        phys_vmem = int(pltpu.get_tpu_info().vmem_capacity_bytes)
    except Exception:
        phys_vmem = 64 * 1024 * 1024
    if phys_vmem >= 100 * 1024 * 1024:        # v5e / v6e: 128 MiB physical VMEM
        vmem_limit = 64 * 1024 * 1024
    else:                                      # v7x: 64 MiB per TensorCore
        vmem_limit = 40 * 1024 * 1024
    # Headroom for scratch, targets, output block and compiler temporaries.
    work_budget = (vmem_limit * 3) // 4

    # Class tile: lane-dense multiple of 128 whenever possible, never larger
    # than C (so all blocks are plain or boundary blocks), capped at 2048.
    if c < 128:
        tile_c = c                             # == full array dim (valid block)
    else:
        tile_c = min(2048, (c // 128) * 128)

    # Row tile: double-buffered input block + ~2 full-tile f32 intermediates
    # (astype / exp temporaries), per the perf review.
    bytes_per_row = tile_c * (2 * in_itemsize + 2 * 4)
    tile_n = work_budget // bytes_per_row
    tile_n = max(8, min(2048, (tile_n // 8) * 8))

    if n <= 8:
        tile_n = n                             # == full array dim (valid block)
    else:
        # Keep >= 2 batch tiles so the "parallel" axis can shard across both
        # TensorCores on v7x; also keeps the block within the batch dim.
        half = _round_up(_round_up(n, 8) // 2, 8)
        tile_n = min(tile_n, max(8, half))
    return tile_n, tile_c, vmem_limit


def my_loss(scores, targets):
    """Equivalent to nn.CrossEntropyLoss()(scores, targets.long()), mean reduction.

    TODO(synk): no ignore_index=-100 handling and no out-of-range-target error,
    unlike PyTorch's CrossEntropyLoss.
    """
    n, c = scores.shape
    tile_n, tile_c, vmem_limit = _choose_tiles(n, c, scores.dtype.itemsize)

    grid_n = pl.cdiv(n, tile_n)
    grid_c = pl.cdiv(c, tile_c)

    tgt = targets.astype(jnp.int32).reshape(n, 1)   # mimics .long() cast

    kernel = functools.partial(
        _ce_kernel,
        n_valid=n, n_classes=c, tile_n=tile_n, tile_c=tile_c,
        needs_c_mask=(c % tile_c != 0),
        needs_row_mask=(grid_n * tile_n != n),
    )

    nll = pl.pallas_call(
        kernel,
        # Output rows are padded up to a whole number of tiles; padded rows are
        # written as exact zeros in-kernel, so the wrapper sums blindly.
        out_shape=jax.ShapeDtypeStruct((grid_n * tile_n, 1), jnp.float32),
        grid_spec=pltpu.PrefetchScalarGridSpec(
            num_scalar_prefetch=0,
            grid=(grid_n, grid_c),
            in_specs=[
                pl.BlockSpec((tile_n, tile_c), lambda i, j: (i, j)),  # logits
                pl.BlockSpec((tile_n, 1), lambda i, j: (i, 0)),       # targets
            ],
            out_specs=pl.BlockSpec((tile_n, 1), lambda i, j: (i, 0)),  # row NLL
            scratch_shapes=[pltpu.VMEM((tile_n, 1), jnp.float32)] * 3,  # m, l, p
        ),
        compiler_params=pltpu.CompilerParams(
            # Batch tiles are independent (megacore-shardable on v7x); the
            # class axis is the online-LSE reduction (must be last / arbitrary).
            dimension_semantics=("parallel", "arbitrary"),
            vmem_limit_bytes=vmem_limit,
        ),
    )(scores, tgt)

    # Tiny final reduce in plain XLA; divide by the true row count.
    return jnp.sum(nll) / jnp.float32(n)


def _reference(scores, targets):
    # Pure-JAX cross entropy (mean), for a sanity check.
    logp = jax.nn.log_softmax(scores.astype(jnp.float32), axis=-1)
    nll = -jnp.take_along_axis(logp, targets.astype(jnp.int32)[:, None], axis=-1)
    return jnp.mean(nll)


if __name__ == "__main__":
    key = jax.random.PRNGKey(0)

    # Small, shape-aligned case (matches the module's typical (N, C) logits).
    k1, k2, k3, k4 = jax.random.split(key, 4)
    N, C = 16, 32
    scores = jax.random.normal(k1, (N, C), dtype=jnp.float32)
    targets = jax.random.randint(k2, (N,), 0, C, dtype=jnp.int32)
    loss = my_loss(scores, targets)
    jax.block_until_ready(loss)
    ref = _reference(scores, targets)
    assert jnp.allclose(loss, ref, rtol=1e-5, atol=1e-5), (loss, ref)

    # Ragged case exercising the in-kernel class/batch tail masks (no padding).
    N2, C2 = 13, 200
    scores2 = jax.random.normal(k3, (N2, C2), dtype=jnp.float32)
    targets2 = jax.random.randint(k4, (N2,), 0, C2, dtype=jnp.int32)
    loss2 = my_loss(scores2, targets2)
    jax.block_until_ready(loss2)
    ref2 = _reference(scores2, targets2)
    assert jnp.allclose(loss2, ref2, rtol=1e-5, atol=1e-5), (loss2, ref2)

    print("KERNEL_OK")
</pallas_src>

<mosaic_0001>
module attributes {stable_mosaic.version = 11 : i64} {
  func.func @_ce_kernel(%arg0: i32, %arg1: i32, %arg2: memref<8x32xf32, #tpu.memory_space<vmem>>, %arg3: memref<8x1xi32, #tpu.memory_space<vmem>>, %arg4: memref<8x1xf32, #tpu.memory_space<vmem>>, %arg5: memref<8x1xf32, #tpu.memory_space<vmem>>, %arg6: memref<8x1xf32, #tpu.memory_space<vmem>>, %arg7: memref<8x1xf32, #tpu.memory_space<vmem>>) attributes {dimension_semantics = [#tpu.dimension_semantics<parallel>, #tpu.dimension_semantics<arbitrary>], iteration_bounds = array<i64: 2, 1>, scalar_prefetch = 0 : i64, scratch_operands = 3 : i64, tpu.core_type = #tpu.core_type<tc>, window_params = [{transform_indices = @transform_0, window_bounds = array<i64: 8, 32>}, {transform_indices = @transform_1, window_bounds = array<i64: 8, 1>}, {transform_indices = @transform_2, window_bounds = array<i64: 8, 1>}]} {
    %c0_i32 = arith.constant 0 : i32
    %0 = arith.cmpi eq, %arg1, %c0_i32 : i32
    %1 = arith.extui %0 : i1 to i32
    %c0_i32_0 = arith.constant 0 : i32
    %2 = arith.cmpi ne, %1, %c0_i32_0 : i32
    scf.if %2 {
      %cst_21 = arith.constant 0xFF800000 : f32
      %38 = vector.broadcast %cst_21 : f32 to vector<8x1xf32>
      %c0_22 = arith.constant 0 : index
      %c0_23 = arith.constant 0 : index
      %39 = vector.load %arg5[%c0_22, %c0_23] : memref<8x1xf32, #tpu.memory_space<vmem>>, vector<8x1xf32>
      tpu.vector_store %arg5[%c0_22, %c0_23], %38 {strides = array<i32>} : memref<8x1xf32, #tpu.memory_space<vmem>>, vector<8x1xf32>,
      %cst_24 = arith.constant 0.000000e+00 : f32
      %40 = vector.broadcast %cst_24 : f32 to vector<8x1xf32>
      %c0_25 = arith.constant 0 : index
      %c0_26 = arith.constant 0 : index
      %41 = vector.load %arg6[%c0_25, %c0_26] : memref<8x1xf32, #tpu.memory_space<vmem>>, vector<8x1xf32>
      tpu.vector_store %arg6[%c0_25, %c0_26], %40 {strides = array<i32>} : memref<8x1xf32, #tpu.memory_space<vmem>>, vector<8x1xf32>,
      %cst_27 = arith.constant 0.000000e+00 : f32
      %42 = vector.broadcast %cst_27 : f32 to vector<8x1xf32>
      %c0_28 = arith.constant 0 : index
      %c0_29 = arith.constant 0 : index
      %43 = vector.load %arg7[%c0_28, %c0_29] : memref<8x1xf32, #tpu.memory_space<vmem>>, vector<8x1xf32>
      tpu.vector_store %arg7[%c0_28, %c0_29], %42 {strides = array<i32>} : memref<8x1xf32, #tpu.memory_space<vmem>>, vector<8x1xf32>,
    } else {
    }
    %c0 = arith.constant 0 : index
    %c0_1 = arith.constant 0 : index
    %3 = vector.load %arg2[%c0, %c0_1] : memref<8x32xf32, #tpu.memory_space<vmem>>, vector<8x32xf32>
    %c0_2 = arith.constant 0 : index
    %c0_3 = arith.constant 0 : index
    %4 = vector.load %arg3[%c0_2, %c0_3] : memref<8x1xi32, #tpu.memory_space<vmem>>, vector<8x1xi32>
    %5 = tpu.iota {dimensions = array<i32: 1>} : vector<1x32xi32>
    %c0_4 = arith.constant 0 : index
    %c0_5 = arith.constant 0 : index
    %6 = vector.load %arg5[%c0_4, %c0_5] : memref<8x1xf32, #tpu.memory_space<vmem>>, vector<8x1xf32>
    %cst = arith.constant dense<0xFF800000> : vector<8xf32>
    %7 = vector.multi_reduction <maximumf>, %3, %cst [1] : vector<8x32xf32> to vector<8xf32>
    %8 = vector.shape_cast %7 : vector<8xf32> to vector<8x1xf32>
    %9 = arith.maximumf %6, %8 : vector<8x1xf32>
    %c0_6 = arith.constant 0 : index
    %c0_7 = arith.constant 0 : index
    %10 = vector.load %arg6[%c0_6, %c0_7] : memref<8x1xf32, #tpu.memory_space<vmem>>, vector<8x1xf32>
    %11 = arith.subf %6, %9 : vector<8x1xf32>
    %12 = math.exp %11 : vector<8x1xf32>
    %13 = arith.mulf %10, %12 : vector<8x1xf32>
    %14 = vector.broadcast %9 : vector<8x1xf32> to vector<8x32xf32>
    %15 = arith.subf %3, %14 : vector<8x32xf32>
    %16 = math.exp %15 : vector<8x32xf32>
    %cst_8 = arith.constant dense<0.000000e+00> : vector<8xf32>
    %17 = vector.multi_reduction <add>, %16, %cst_8 [1] : vector<8x32xf32> to vector<8xf32>
    %18 = vector.shape_cast %17 : vector<8xf32> to vector<8x1xf32>
    %19 = arith.addf %13, %18 : vector<8x1xf32>
    %c0_9 = arith.constant 0 : index
    %c0_10 = arith.constant 0 : index
    %20 = vector.load %arg6[%c0_9, %c0_10] : memref<8x1xf32, #tpu.memory_space<vmem>>, vector<8x1xf32>
    tpu.vector_store %arg6[%c0_9, %c0_10], %19 {strides = array<i32>} : memref<8x1xf32, #tpu.memory_space<vmem>>, vector<8x1xf32>,
    %c0_11 = arith.constant 0 : index
    %c0_12 = arith.constant 0 : index
    %21 = vector.load %arg5[%c0_11, %c0_12] : memref<8x1xf32, #tpu.memory_space<vmem>>, vector<8x1xf32>
    tpu.vector_store %arg5[%c0_11, %c0_12], %9 {strides = array<i32>} : memref<8x1xf32, #tpu.memory_space<vmem>>, vector<8x1xf32>,
    %c32_i32 = arith.constant 32 : i32
    %22 = arith.muli %arg1, %c32_i32 : i32
    %23 = vector.broadcast %22 : i32 to vector<8x1xi32>
    %24 = arith.subi %4, %23 : vector<8x1xi32>
    %c0_13 = arith.constant 0 : index
    %c0_14 = arith.constant 0 : index
    %25 = vector.load %arg7[%c0_13, %c0_14] : memref<8x1xf32, #tpu.memory_space<vmem>>, vector<8x1xf32>
    %26 = vector.broadcast %5 : vector<1x32xi32> to vector<8x32xi32>
    %27 = vector.broadcast %24 : vector<8x1xi32> to vector<8x32xi32>
    %28 = arith.cmpi eq, %26, %27 : vector<8x32xi32>
    %cst_15 = arith.constant 0.000000e+00 : f32
    %29 = vector.broadcast %cst_15 : f32 to vector<8x32xf32>
    %30 = arith.select %28, %3, %29 : vector<8x32xi1>, vector<8x32xf32>
    %cst_16 = arith.constant dense<0.000000e+00> : vector<8xf32>
    %31 = vector.multi_reduction <add>, %30, %cst_16 [1] : vector<8x32xf32> to vector<8xf32>
    %32 = vector.shape_cast %31 : vector<8xf32> to vector<8x1xf32>
    %33 = arith.addf %25, %32 : vector<8x1xf32>
    %c0_17 = arith.constant 0 : index
    %c0_18 = arith.constant 0 : index
    %34 = vector.load %arg7[%c0_17, %c0_18] : memref<8x1xf32, #tpu.memory_space<vmem>>, vector<8x1xf32>
    tpu.vector_store %arg7[%c0_17, %c0_18], %33 {strides = array<i32>} : memref<8x1xf32, #tpu.memory_space<vmem>>, vector<8x1xf32>,
    %c0_i32_19 = arith.constant 0 : i32
    %35 = arith.cmpi eq, %arg1, %c0_i32_19 : i32
    %36 = arith.extui %35 : i1 to i32
    %c0_i32_20 = arith.constant 0 : i32
    %37 = arith.cmpi ne, %36, %c0_i32_20 : i32
    scf.if %37 {
      %c0_21 = arith.constant 0 : index
      %c0_22 = arith.constant 0 : index
      %38 = vector.load %arg5[%c0_21, %c0_22] : memref<8x1xf32, #tpu.memory_space<vmem>>, vector<8x1xf32>
      %c0_23 = arith.constant 0 : index
      %c0_24 = arith.constant 0 : index
      %39 = vector.load %arg6[%c0_23, %c0_24] : memref<8x1xf32, #tpu.memory_space<vmem>>, vector<8x1xf32>
      %40 = math.log %39 : vector<8x1xf32>
      %41 = arith.addf %38, %40 : vector<8x1xf32>
      %c0_25 = arith.constant 0 : index
      %c0_26 = arith.constant 0 : index
      %42 = vector.load %arg7[%c0_25, %c0_26] : memref<8x1xf32, #tpu.memory_space<vmem>>, vector<8x1xf32>
      %43 = arith.subf %41, %42 : vector<8x1xf32>
      %c0_27 = arith.constant 0 : index
      %c0_28 = arith.constant 0 : index
      %44 = vector.load %arg4[%c0_27, %c0_28] : memref<8x1xf32, #tpu.memory_space<vmem>>, vector<8x1xf32>
      tpu.vector_store %arg4[%c0_27, %c0_28], %43 {strides = array<i32>} : memref<8x1xf32, #tpu.memory_space<vmem>>, vector<8x1xf32>,
    } else {
    }
    return
  }
  func.func @transform_0(%arg0: i32, %arg1: i32) -> (i32, i32) {
    %c0_i32 = arith.constant 0 : i32
    return %arg0, %arg1 : i32, i32
  }
  func.func @transform_1(%arg0: i32, %arg1: i32) -> (i32, i32) {
    %c0_i32 = arith.constant 0 : i32
    %c0_i32_0 = arith.constant 0 : i32
    return %arg0, %c0_i32 : i32, i32
  }
  func.func @transform_2(%arg0: i32, %arg1: i32) -> (i32, i32) {
    %c0_i32 = arith.constant 0 : i32
    %c0_i32_0 = arith.constant 0 : i32
    return %arg0, %c0_i32 : i32, i32
  }
}

</mosaic_0001>

<llo_original>
// kernel: tpu_custom_call.1
$region0: #{tpu_custom_call.1}
  #allocation0 [shape = 'u32[]', space=smem, size = 0x4, offset = 0x4, fixed_abs, tag = 'smem constant byte address 0x4 - core index']
  #allocation1 [shape = 'u32[144,128]{1,0:T(1,128)}', space=vmem, size = 0x12000, scoped, tag = 'internal scratch']
  #allocation2 [shape = 'f32[8,1]{1,0:T(8,128)}', space=vmem, size = 0x1000, scoped, tag = 'scratch operand']
  #allocation3 [shape = 'f32[8,1]{1,0:T(8,128)}', space=vmem, size = 0x1000, scoped, tag = 'scratch operand']
  #allocation4 [shape = 'f32[8,1]{1,0:T(8,128)}', space=vmem, size = 0x1000, scoped, tag = 'scratch operand']
  %s0 = inlined_call_operand.vmem [shape: f32[16,32], index: 0, kind: input, shape index: {}]
  %s1 = inlined_call_operand.vmem [shape: s32[16,1], index: 1, kind: input, shape index: {}]
  %s2 = inlined_call_operand.vmem [shape: f32[16,1], index: 2, kind: output, shape index: {}]
  %s3 = sld [smem:[#allocation0]]
  $region49: #{tpu_custom_call.1} parent=0
    _
  %s5 = ssub.s32 1, %s3
  %s6 = scalar_select 0, %s5, %s3
  loop: start=0, step=1, limit=4
  $region2: #{tpu_custom_call.1} parent=0 // loop_pre_header
    _
  $region3: #{tpu_custom_call.1} parent=0 // loop_header
    %s8 = sphi 0, %s12
    %p9 = scmp.ge.s32.totalorder %s8, 4
    %s15 = sphi 0, %s27
    %s16 = sphi 0, %s23
    %s17 = sphi 0, %s15
    %s18 = sphi 0, %s16
    %s19 = sphi 0, %s17
    %s20 = sphi 0, %s18
    %s32 = sphi 0, %s34
    %s35 = sphi 0, %s32
    %s36 = sphi 0, %s35
    %s52 = sphi 0, %s36
    %s58 = sphi 0, %s60
    %s61 = sphi 0, %s58
    %s62 = sphi 0, %s61
    %s78 = sphi 0, %s62
    %s84 = sphi 0, %s86
    %s87 = sphi 0, %s84
    %s88 = sphi 0, %s87
    %s104 = sphi 0, %s88
  $region4: #{tpu_custom_call.1} parent=0 // loop_header_branch
    %11 = sbr.rel (%p9) target = $region8
  $region5: #{tpu_custom_call.1} parent=0 // loop_body
    %s13 = ssub.s32 %s8, 1
    %s14 = ssub.s32 %s8, 2
    %s21 = sadd.s32 1, %s16
    %p22 = scmp.ge.s32.totalorder %s21, 1
    %s23 = scalar_select %p22, 0, %s21
    %s24 = sadd.s32 1, %s15
    %s25 = scalar_select %p22, %s24, %s15
    %p26 = scmp.ge.s32.totalorder %s25, 2
    %s27 = scalar_select %p26, 0, %s25
    %s28 = ssub.s32 %s15, %s27
    %s29 = ssub.s32 %s16, %s23
    %s30 = sor.u32 %s28, %s29
    %p31 = scmp.eq.s32.totalorder %s30, 0
    %s33 = sadd.s32 %s32, 1
    %s34 = scalar_select %p31, %s32, %s33
    %p37 = pneg %p31
    %p38 = scmp.eq.s32.totalorder %s8, 1
    %p39 = por %p37, %p38
    %p40 = scmp.ne.s32.totalorder %s32, %s35
    %p41 = scmp.eq.s32.totalorder %s8, 0
    %p42 = por %p40, %p41
    %p43 = scmp.ne.s32.totalorder %s32, %s35
    %p44 = scmp.eq.s32.totalorder %s13, 1
    %p45 = por %p43, %p44
    %p46 = scmp.ne.s32.totalorder %s35, %s36
    %p47 = scmp.eq.s32.totalorder %s13, 0
    %p48 = por %p46, %p47
    %p49 = scmp.ne.s32.totalorder %s35, %s36
    %p50 = scmp.eq.s32.totalorder %s14, 1
    %p51 = por %p49, %p50
    %p53 = scmp.ne.s32.totalorder %s36, %s52
    %p54 = scmp.eq.s32.totalorder %s14, 0
    %p55 = por %p53, %p54
    %s56 = ssub.s32 %s15, %s27
    %p57 = scmp.eq.s32.totalorder %s56, 0
    %s59 = sadd.s32 %s58, 1
    %s60 = scalar_select %p57, %s58, %s59
    %p63 = pneg %p57
    %p64 = scmp.eq.s32.totalorder %s8, 1
    %p65 = por %p63, %p64
    %p66 = scmp.ne.s32.totalorder %s58, %s61
    %p67 = scmp.eq.s32.totalorder %s8, 0
    %p68 = por %p66, %p67
    %p69 = scmp.ne.s32.totalorder %s58, %s61
    %p70 = scmp.eq.s32.totalorder %s13, 1
    %p71 = por %p69, %p70
    %p72 = scmp.ne.s32.totalorder %s61, %s62
    %p73 = scmp.eq.s32.totalorder %s13, 0
    %p74 = por %p72, %p73
    %p75 = scmp.ne.s32.totalorder %s61, %s62
    %p76 = scmp.eq.s32.totalorder %s14, 1
    %p77 = por %p75, %p76
    %p79 = scmp.ne.s32.totalorder %s62, %s78
    %p80 = scmp.eq.s32.totalorder %s14, 0
    %p81 = por %p79, %p80
    %s82 = ssub.s32 %s15, %s27
    %p83 = scmp.eq.s32.totalorder %s82, 0
    %s85 = sadd.s32 %s84, 1
    %s86 = scalar_select %p83, %s84, %s85
    %p89 = pneg %p83
    %p90 = scmp.eq.s32.totalorder %s8, 1
    %p91 = por %p89, %p90
    %p92 = scmp.ne.s32.totalorder %s84, %s87
    %p93 = scmp.eq.s32.totalorder %s8, 0
    %p94 = por %p92, %p93
    %p95 = scmp.ne.s32.totalorder %s84, %s87
    %p96 = scmp.eq.s32.totalorder %s13, 1
    %p97 = por %p95, %p96
    %p98 = scmp.ne.s32.totalorder %s87, %s88
    %p99 = scmp.eq.s32.totalorder %s13, 0
    %p100 = por %p98, %p99
    %p101 = scmp.ne.s32.totalorder %s87, %s88
    %p102 = scmp.eq.s32.totalorder %s14, 1
    %p103 = por %p101, %p102
    %p105 = scmp.ne.s32.totalorder %s88, %s104
    %p106 = scmp.eq.s32.totalorder %s14, 0
    %p107 = por %p105, %p106
    %p108 = scmp.le.s32.totalorder 1, %s8
    %p109 = scmp.lt.s32.totalorder %s8, 3
    %p110 = pnand %p108, %p109
    %p111 = pneg %p110
    // Predicated region
    $region9: #{tpu_custom_call.1} parent=5 // pred_check
      _
    $region10: #{tpu_custom_call.1} parent=5 // pred_check_branch
      %113 = sbr.rel (%p110) target = $region12
    $region11: #{tpu_custom_call.1} parent=5 // pred_region
      %s114 = ssub.s32 %s8, 1
    $region12: #{tpu_custom_call.1} parent=5 // pred_fallthru
      _
    %p115 = scmp.lt.s32.totalorder %s8, 2
    // Predicated region
    $region13: #{tpu_custom_call.1} parent=5 // pred_check
      %p116 = pneg %p115
    $region14: #{tpu_custom_call.1} parent=5 // pred_check_branch
      %118 = sbr.rel (%p116) target = $region16
    $region15: #{tpu_custom_call.1} parent=5 // pred_region
      // Predicated region
      $region17: #{tpu_custom_call.1} parent=15 // pred_check
        %p119 = pneg %p42
      $region18: #{tpu_custom_call.1} parent=15 // pred_check_branch
        %121 = sbr.rel (%p119) target = $region20
      $region19: #{tpu_custom_call.1} parent=15 // pred_region
        %p122 = scmp.lt.s32.totalorder %s15, 1
        %s123 = scalar_select %p122, %s15, 1
        %p124 = scmp.lt.s32.totalorder %s16, 0
        %s125 = scalar_select %p124, %s16, 0
        %s126 = sadd.s32 %s125, %s123
        %s127 = smul.addr %s126, 8
        %s128 = scalar_lea.vmem %s0, %s127
      $region20: #{tpu_custom_call.1} parent=15 // pred_fallthru
        _
      // Predicated region
      $region21: #{tpu_custom_call.1} parent=15 // pred_check
        %p129 = pneg %p68
      $region22: #{tpu_custom_call.1} parent=15 // pred_check_branch
        %131 = sbr.rel (%p129) target = $region24
      $region23: #{tpu_custom_call.1} parent=15 // pred_region
        %p132 = scmp.lt.s32.totalorder %s15, 1
        %s133 = scalar_select %p132, %s15, 1
        %s134 = smul.addr %s133, 8
        %s135 = scalar_lea.vmem %s1, %s134
      $region24: #{tpu_custom_call.1} parent=15 // pred_fallthru
        _
    $region16: #{tpu_custom_call.1} parent=5 // pred_fallthru
      _
    %p136 = scmp.le.s32.totalorder 1, %s8
    %p137 = scmp.lt.s32.totalorder %s8, 3
    %p138 = pnand %p136, %p137
    %p139 = pneg %p138
    // Predicated region
    $region25: #{tpu_custom_call.1} parent=5 // pred_check
      _
    $region26: #{tpu_custom_call.1} parent=5 // pred_check_branch
      %141 = sbr.rel (%p138) target = $region28
    $region27: #{tpu_custom_call.1} parent=5 // pred_region
      %s142 = ssub.s32 %s8, 1
      %p143 = scmp.lt.s32.totalorder %s17, 1
      %s144 = scalar_select %p143, %s17, 1
      %p145 = scmp.lt.s32.totalorder %s18, 0
      %s146 = scalar_select %p145, %s18, 0
      %s147 = sadd.s32 %s146, %s144
      %s148 = smul.addr %s147, 8
      %s149 = scalar_lea.vmem %s0, %s148
      %p150 = pneg %p48
      %p151 = pneg %p45
      %p152 = scmp.lt.s32.totalorder %s17, 1
      %s153 = scalar_select %p152, %s17, 1
      %s154 = smul.addr %s153, 8
      %s155 = scalar_lea.vmem %s1, %s154
      %p156 = pneg %p74
      %p157 = pneg %p71
      %p158 = pneg %p100
      %p159 = pneg %p97
      %p160 = scmp.lt.s32.totalorder %s17, 1
      %s161 = scalar_select %p160, %s17, 1
      %s162 = smul.addr %s161, 8
      %s163 = scalar_lea.vmem %s2, %s162
      %p164 = scmp.lt.s32.totalorder %s17, 1
      %s165 = scalar_select %p164, %s17, 1
      %p166 = scmp.lt.s32.totalorder %s18, 0
      %s167 = scalar_select %p166, %s18, 0
      %s168 = sadd.s32 %s167, %s165
      %s169 = smul.addr %s168, 8
      %s170 = scalar_lea.vmem %s0, %s169
      %p171 = scmp.lt.s32.totalorder %s17, 1
      %s172 = scalar_select %p171, %s17, 1
      %s173 = smul.addr %s172, 8
      %s174 = scalar_lea.vmem %s1, %s173
      %p175 = scmp.lt.s32.totalorder %s17, 1
      %s176 = scalar_select %p175, %s17, 1
      %s177 = smul.addr %s176, 8
      %s178 = scalar_lea.vmem %s2, %s177
      %p179 = scmp.eq.s32.totalorder %s18, 0
      // Predicated region
      $region29: #{tpu_custom_call.1} parent=27 // pred_check
        %p180 = pneg %p179
      $region30: #{tpu_custom_call.1} parent=27 // pred_check_branch
        %182 = sbr.rel (%p180) target = $region32
      $region31: #{tpu_custom_call.1} parent=27 // pred_region
        %vm183 = vcmask 7168
        %184 = vst.msk [vmem:[#allocation2] sm:$0xff] %vm183, -inf
        %185 = vst.msk [vmem:[#allocation3] sm:$0xff] %vm183, 0.0
        %186 = vst.msk [vmem:[#allocation4] sm:$0xff] %vm183, 0.0
      $region32: #{tpu_custom_call.1} parent=27 // pred_fallthru
        _
      %v187 = vld [vmem:[%s170] sm:$0xff]
      %v188 = vld [vmem:[%s174] sm:$0xff]
      %v189 = vlaneseq
      %v190 = vand.u32 %v189, 127
      %v191 = vld [vmem:[#allocation2] sm:$0xff]
      %vm192 = vcmask 261120
      %v193 = vsel %vm192, %v187, -inf
      %194 = vmax.xlane.f32.xlu0 %v193
      %v195 = vpop.xlane.xlu0 %194
      %v196 = vmax.f32 %v191, %v195
      %v197 = vld [vmem:[#allocation3] sm:$0xff]
      %v198 = vsub.f32 %v191, %v196
      %v199 = vmul.f32 %v198, 1.442695
      %v200 = vpow.pop %v199
      %v201 = vmul.f32 %v197, %v200
      %203 = vset.pattern.permute.xlu0 0
      %204 = vperm.xlu0 %203, %v196
      %v205 = vpop.permute.xlu0 %204
      %v207 = vsub.f32 %v187, %v205
      %v208 = vmul.f32 %v207, 1.442695
      %v209 = vpow.pop %v208
      %v210 = vsel %vm192, %v209, 0.0
      %211 = vadd.xlane.f32.xlu0 %v210
      %v212 = vpop.xlane.xlu0 %211
      %v213 = vadd.f32 %v201, %v212
      %vm214 = vcmask 7168
      %215 = vst.msk [vmem:[#allocation3] sm:$0xff] %vm214, %v213
      %216 = vst.msk [vmem:[#allocation2] sm:$0xff] %vm214, %v196
      %s217 = smul.u32 %s18, 32
      %v218 = vstv %s217
      %v219 = vsub.s32 %v188, %v218
      %v220 = vld [vmem:[#allocation4] sm:$0xff]
      %221 = vset.pattern.permute.xlu0 0
      %222 = vperm.xlu0 %221, %v219
      %v223 = vpop.permute.xlu0 %222
      %vm224 = vcmp.eq.s32.totalorder %v190, %v223
      %v225 = vsel %vm224, %v187, 0.0
      %v226 = vsel %vm192, %v225, 0.0
      %227 = vadd.xlane.f32.xlu0 %v226
      %v228 = vpop.xlane.xlu0 %227
      %v229 = vadd.f32 %v220, %v228
      %230 = vst.msk [vmem:[#allocation4] sm:$0xff] %vm214, %v229
      // Predicated region
      $region33: #{tpu_custom_call.1} parent=27 // pred_check
        %p231 = pneg %p179
      $region34: #{tpu_custom_call.1} parent=27 // pred_check_branch
        %233 = sbr.rel (%p231) target = $region36
      $region35: #{tpu_custom_call.1} parent=27 // pred_region
        %v234 = vld [vmem:[#allocation2] sm:$0xff]
        %v235 = vld [vmem:[#allocation3] sm:$0xff]
        %v236 = vlog2.pop %v235
        %v237 = vmul.f32 %v236, 0.6931472
        %v238 = vadd.f32 %v234, %v237
        %v239 = vld [vmem:[#allocation4] sm:$0xff]
        %v240 = vsub.f32 %v238, %v239
        %241 = vst.msk [vmem:[%s178] sm:$0xff] %vm214, %v240
      $region36: #{tpu_custom_call.1} parent=27 // pred_fallthru
        _
      %p242 = scmp.lt.s32.totalorder %s17, 1
      %s243 = scalar_select %p242, %s17, 1
      %s244 = smul.addr %s243, 8
      %s245 = scalar_lea.vmem %s2, %s244
      // Predicated region
      $region37: #{tpu_custom_call.1} parent=27 // pred_check
        %p246 = pneg %p97
      $region38: #{tpu_custom_call.1} parent=27 // pred_check_branch
        %248 = sbr.rel (%p246) target = $region40
      $region39: #{tpu_custom_call.1} parent=27 // pred_region
        _
      $region40: #{tpu_custom_call.1} parent=27 // pred_fallthru
        _
    $region28: #{tpu_custom_call.1} parent=5 // pred_fallthru
      _
    %p249 = scmp.le.s32.totalorder 2, %s8
    // Predicated region
    $region41: #{tpu_custom_call.1} parent=5 // pred_check
      %p250 = pneg %p249
    $region42: #{tpu_custom_call.1} parent=5 // pred_check_branch
      %252 = sbr.rel (%p250) target = $region44
    $region43: #{tpu_custom_call.1} parent=5 // pred_region
      %s253 = ssub.s32 %s8, 2
      // Predicated region
      $region45: #{tpu_custom_call.1} parent=43 // pred_check
        %p254 = pneg %p103
      $region46: #{tpu_custom_call.1} parent=43 // pred_check_branch
        %256 = sbr.rel (%p254) target = $region48
      $region47: #{tpu_custom_call.1} parent=43 // pred_region
        %p257 = scmp.lt.s32.totalorder %s19, 1
        %s258 = scalar_select %p257, %s19, 1
        %s259 = smul.addr %s258, 8
        %s260 = scalar_lea.vmem %s2, %s259
      $region48: #{tpu_custom_call.1} parent=43 // pred_fallthru
        _
    $region44: #{tpu_custom_call.1} parent=5 // pred_fallthru
      _
  $region6: #{tpu_custom_call.1} parent=0 // loop_footer
    %s12 = sadd.s32 1, %s8
  $region7: #{tpu_custom_call.1} parent=0 // loop_footer_branch
    %7 = sbr.rel target = $region3
  $region8: #{tpu_custom_call.1} parent=0 // loop_exit
    _

</llo_original>
